<compile_context>
chip_gen: v5e
topology: v5e:2x2
jax: 0.10.0
libtpu: 0.0.40
codegen_flags: <defaults>
</compile_context>

<pallas_src>
import functools

import jax
import jax.numpy as jnp
from jax.experimental import pallas as pl
from jax.experimental.pallas import tpu as pltpu


# ----------------------------- kernel body ---------------------------------


def _upsample_kernel(x_ref, o_ref, *, factor: int, d: int):
    # x_ref block: (row_tile, D); o_ref block: (row_tile, factor*D).
    # Row-major, out[row, f*D + j] == in[row, j] reproduces repeat_interleave
    # along the (collapsed) sequence axis exactly.
    x = x_ref[...]
    for f in range(factor):                 # static slices -> zero-cost views
        o_ref[:, f * d:(f + 1) * d] = x


# ----------------------------- helpers --------------------------------------


def _round_up(x: int, m: int) -> int:
    return ((x + m - 1) // m) * m


def _vmem_capacity_bytes() -> int:
    """Physical VMEM per TensorCore; conservative fallback if query fails."""
    try:
        return int(pltpu.get_tpu_info().vmem_capacity_bytes)
    except Exception:
        return 64 << 20                      # v7x per-TC size: safe everywhere


def _pick_row_tile(n_rows: int, d: int, factor: int, dtype_bytes: int,
                   sublane: int, vmem_budget: int) -> int:
    """Largest sublane-aligned row tile whose double-buffered in+out tiles fit
    the budget, with an even (>=2 where sensible) grid-step count so both v7x
    TensorCores stay balanced."""
    per_row = 2 * (1 + factor) * d * dtype_bytes     # 2 bufs x (in + out) / row
    max_rows = max(sublane, (vmem_budget // per_row) // sublane * sublane)
    rows_padded = _round_up(n_rows, sublane)

    if max_rows >= rows_padded:
        # Whole problem fits in one block.  Prefer 2 balanced steps so the
        # "parallel" grid axis shards across both v7x TensorCores.
        if n_rows >= 2 * sublane:
            return _round_up(pl.cdiv(n_rows, 2), sublane)
        return n_rows                                 # tiny: full-extent block

    # Multiple steps required: round the step count up to an even number so a
    # 2-way core split never sees a 2:1 load imbalance.
    steps = _round_up(pl.cdiv(rows_padded, max_rows), 2)
    return _round_up(pl.cdiv(n_rows, steps), sublane)


# ----------------------------- public wrapper -------------------------------


def upsampling(x: jax.Array, factor: int) -> jax.Array:
    """Pallas equivalent of torch.repeat_interleave(x, factor, dim=1) for (B, S, D)."""
    B, S, D = x.shape
    if factor == 1:
        return x

    n_rows = B * S
    dtype_bytes = jnp.dtype(x.dtype).itemsize
    sublane = max(8, 32 // dtype_bytes)               # 8 f32 / 16 bf16 / 32 int8

    out_bytes = n_rows * factor * D * dtype_bytes
    vmem_cap = _vmem_capacity_bytes()
    # Generation-aware ceilings: ~40 MiB scoped limit on v7x (64 MiB VMEM),
    # ~96 MiB on v5e/v6e (128 MiB VMEM); tile budget is half the capacity.
    limit_cap = min(vmem_cap - (24 << 20), 96 << 20)
    tile_budget = min(vmem_cap // 2, 64 << 20)

    min_tile_bytes = 2 * (1 + factor) * sublane * D * dtype_bytes

    # Fallbacks where the Pallas path is not the right tool:
    #   * lane-misaligned D (masked vst.msk partial stores, ~4.5x slower),
    #   * tiny inputs (fixed pallas_call / per-step overhead dominates),
    #   * even the minimum tile would blow the scoped-VMEM ceiling.
    if (D % 128 != 0) or (out_bytes < (256 << 10)) or (min_tile_bytes > limit_cap):
        return jnp.repeat(x, factor, axis=1)

    x2 = x.reshape(n_rows, D)                         # free row-major view
    row_tile = _pick_row_tile(n_rows, D, factor, dtype_bytes, sublane,
                              tile_budget)
    grid = (pl.cdiv(n_rows, row_tile),)

    # Scoped-VMEM limit derived from the actual double-buffered tile footprint
    # plus headroom for Mosaic internal scratch, clamped to the per-chip cap.
    tile_bytes = 2 * (1 + factor) * row_tile * D * dtype_bytes
    vmem_limit = max(min(tile_bytes + (4 << 20), limit_cap), 16 << 20)

    kernel = functools.partial(_upsample_kernel, factor=factor, d=D)
    bytes_accessed = (1 + factor) * n_rows * D * dtype_bytes

    out2 = pl.pallas_call(
        kernel,
        out_shape=jax.ShapeDtypeStruct((n_rows, factor * D), x.dtype),
        grid=grid,
        in_specs=[
            pl.BlockSpec((row_tile, D), lambda i: (i, 0)),
        ],
        out_specs=pl.BlockSpec((row_tile, factor * D), lambda i: (i, 0)),
        compiler_params=pltpu.CompilerParams(
            dimension_semantics=("parallel",),
            vmem_limit_bytes=vmem_limit,
        ),
        cost_estimate=pl.CostEstimate(
            flops=0, transcendentals=0, bytes_accessed=bytes_accessed),
    )(x2)

    # (B*S, factor*D) row-major == (B, S*factor, D) row-major: free reshape.
    return out2.reshape(B, S * factor, D)


# ----------------------------- demo / self-test ------------------------------


if __name__ == "__main__":
    key = jax.random.PRNGKey(0)

    # 1) Spec-consistent small shape (Conformer time-upsampling):
    #    batch=2, seq=8, hidden=32, factor=2.  D%128 != 0 and the size is tiny,
    #    so this exercises the guarded jnp.repeat fast path.
    B, S, D, factor = 2, 8, 32, 2
    x_small = jax.random.normal(key, (B, S, D), dtype=jnp.float32)
    out_small = jax.block_until_ready(upsampling(x_small, factor))
    ref_small = jnp.repeat(x_small, factor, axis=1)
    assert out_small.shape == (B, S * factor, D), out_small.shape
    assert out_small.dtype == x_small.dtype
    assert jnp.array_equal(out_small, ref_small), "small-path mismatch"

    # 2) Lane-dense shape that exercises the Pallas kernel path:
    #    batch=2, seq=256, hidden=128, factor=2 (output 512 KiB, D % 128 == 0).
    B2, S2, D2, factor2 = 2, 256, 128, 2
    x_big = jax.random.normal(jax.random.PRNGKey(0), (B2, S2, D2),
                              dtype=jnp.float32)
    out_big = jax.block_until_ready(upsampling(x_big, factor2))
    ref_big = jnp.repeat(x_big, factor2, axis=1)
    assert out_big.shape == (B2, S2 * factor2, D2), out_big.shape
    assert out_big.dtype == x_big.dtype
    assert jnp.array_equal(out_big, ref_big), "kernel-path mismatch"

    print("KERNEL_OK")
</pallas_src>

<mosaic_0001>
module attributes {stable_mosaic.version = 11 : i64} {
  func.func @_upsample_kernel(%arg0: i32, %arg1: memref<256x128xf32, #tpu.memory_space<vmem>>, %arg2: memref<256x256xf32, #tpu.memory_space<vmem>>) attributes {dimension_semantics = [#tpu.dimension_semantics<parallel>], iteration_bounds = array<i64: 2>, scalar_prefetch = 0 : i64, scratch_operands = 0 : i64, tpu.core_type = #tpu.core_type<tc>, window_params = [{transform_indices = @transform_0, window_bounds = array<i64: 256, 128>}, {transform_indices = @transform_1, window_bounds = array<i64: 256, 256>}]} {
    %c0 = arith.constant 0 : index
    %c0_0 = arith.constant 0 : index
    %0 = vector.load %arg1[%c0, %c0_0] : memref<256x128xf32, #tpu.memory_space<vmem>>, vector<256x128xf32>
    %c0_1 = arith.constant 0 : index
    %c0_2 = arith.constant 0 : index
    %1 = vector.load %arg2[%c0_1, %c0_2] : memref<256x256xf32, #tpu.memory_space<vmem>>, vector<256x128xf32>
    tpu.vector_store %arg2[%c0_1, %c0_2], %0 {strides = array<i32>} : memref<256x256xf32, #tpu.memory_space<vmem>>, vector<256x128xf32>,
    %c0_3 = arith.constant 0 : index
    %c128 = arith.constant 128 : index
    %2 = vector.load %arg2[%c0_3, %c128] : memref<256x256xf32, #tpu.memory_space<vmem>>, vector<256x128xf32>
    tpu.vector_store %arg2[%c0_3, %c128], %0 {strides = array<i32>} : memref<256x256xf32, #tpu.memory_space<vmem>>, vector<256x128xf32>,
    return
  }
  func.func @transform_0(%arg0: i32) -> (i32, i32) {
    %c0_i32 = arith.constant 0 : i32
    %c0_i32_0 = arith.constant 0 : i32
    return %arg0, %c0_i32 : i32, i32
  }
  func.func @transform_1(%arg0: i32) -> (i32, i32) {
    %c0_i32 = arith.constant 0 : i32
    %c0_i32_0 = arith.constant 0 : i32
    return %arg0, %c0_i32 : i32, i32
  }
}

</mosaic_0001>

<llo_original>
// kernel: tpu_custom_call.1
$region0: #{tpu_custom_call.1}
  #allocation0 [shape = 'u32[]', space=smem, size = 0x4, offset = 0x4, fixed_abs, tag = 'smem constant byte address 0x4 - core index']
  #allocation1 [shape = 'u32[72,128]{1,0:T(1,128)}', space=vmem, size = 0x9000, scoped, tag = 'internal scratch']
  %s0 = inlined_call_operand.hbm [shape: f32[512,128], index: 0, kind: input, shape index: {}]
  %s1 = inlined_call_operand.hbm [shape: f32[512,256], index: 1, kind: output, shape index: {}]
  %s2 = sld [smem:[#allocation0]]
  $region41: #{tpu_custom_call.1} parent=0
    _
  %s4 = ssub.s32 1, %s2
  %s5 = scalar_select 0, %s4, %s2
  $region1: #{tpu_custom_call.1} parent=0
    #allocation2 [shape = 'u8[262144]{0}', space=vmem, size = 0x40000, scoped, tag = 'input window, operand 0']
    #allocation3 [shape = 's32[2]{0}', space=sflag, size = 0x8, scoped, tag = 'scoped memory for tpu_custom_call.1']
    #allocation4 [shape = 's32[2]{0}', space=sflag, size = 0x8, scoped, tag = 'scoped memory for tpu_custom_call.1']
    #allocation5 [shape = 'u8[524288]{0}', space=vmem, size = 0x80000, scoped, tag = 'output window, operand 0']
    %6 = vsyncpa [#allocation3], 0
    %s7 = scalar_lea.sflag [#allocation3], 1
    %8 = vsyncpa %s7, 0
    %9 = vsyncpa [#allocation4], 0
    %s10 = scalar_lea.sflag [#allocation4], 1
    %11 = vsyncpa %s10, 0
    loop: start=0, step=1, limit=4
    $region2: #{tpu_custom_call.1} parent=1 // loop_pre_header
      _
    $region3: #{tpu_custom_call.1} parent=1 // loop_header
      %s13 = sphi 0, %s17
      %p14 = scmp.ge.s32.totalorder %s13, 4
      %s23 = sphi 0, %s25
      %s26 = sphi 0, %s23
      %s27 = sphi 0, %s26
      %s43 = sphi 0, %s27
      %s49 = sphi 0, %s51
      %s52 = sphi 0, %s49
      %s53 = sphi 0, %s52
      %s69 = sphi 0, %s53
    $region4: #{tpu_custom_call.1} parent=1 // loop_header_branch
      %16 = sbr.rel (%p14) target = $region8
    $region5: #{tpu_custom_call.1} parent=1 // loop_body
      %s18 = ssub.s32 %s13, 1
      %s19 = ssub.s32 %s13, 2
      %s20 = sadd.s32 %s13, 1
      %s21 = ssub.s32 %s13, %s20
      %p22 = scmp.eq.s32.totalorder %s21, 0
      %s24 = sadd.s32 %s23, 1
      %s25 = scalar_select %p22, %s23, %s24
      %p28 = pneg %p22
      %p29 = scmp.eq.s32.totalorder %s13, 1
      %p30 = por %p28, %p29
      %p31 = scmp.ne.s32.totalorder %s23, %s26
      %p32 = scmp.eq.s32.totalorder %s13, 0
      %p33 = por %p31, %p32
      %p34 = scmp.ne.s32.totalorder %s23, %s26
      %p35 = scmp.eq.s32.totalorder %s18, 1
      %p36 = por %p34, %p35
      %p37 = scmp.ne.s32.totalorder %s26, %s27
      %p38 = scmp.eq.s32.totalorder %s18, 0
      %p39 = por %p37, %p38
      %p40 = scmp.ne.s32.totalorder %s26, %s27
      %p41 = scmp.eq.s32.totalorder %s19, 1
      %p42 = por %p40, %p41
      %p44 = scmp.ne.s32.totalorder %s27, %s43
      %p45 = scmp.eq.s32.totalorder %s19, 0
      %p46 = por %p44, %p45
      %s47 = ssub.s32 %s13, %s20
      %p48 = scmp.eq.s32.totalorder %s47, 0
      %s50 = sadd.s32 %s49, 1
      %s51 = scalar_select %p48, %s49, %s50
      %p54 = pneg %p48
      %p55 = scmp.eq.s32.totalorder %s13, 1
      %p56 = por %p54, %p55
      %p57 = scmp.ne.s32.totalorder %s49, %s52
      %p58 = scmp.eq.s32.totalorder %s13, 0
      %p59 = por %p57, %p58
      %p60 = scmp.ne.s32.totalorder %s49, %s52
      %p61 = scmp.eq.s32.totalorder %s18, 1
      %p62 = por %p60, %p61
      %p63 = scmp.ne.s32.totalorder %s52, %s53
      %p64 = scmp.eq.s32.totalorder %s18, 0
      %p65 = por %p63, %p64
      %p66 = scmp.ne.s32.totalorder %s52, %s53
      %p67 = scmp.eq.s32.totalorder %s19, 1
      %p68 = por %p66, %p67
      %p70 = scmp.ne.s32.totalorder %s53, %s69
      %p71 = scmp.eq.s32.totalorder %s19, 0
      %p72 = por %p70, %p71
      %p73 = scmp.le.s32.totalorder 1, %s13
      %p74 = scmp.lt.s32.totalorder %s13, 3
      %p75 = pnand %p73, %p74
      %p76 = pneg %p75
      // Predicated region
      $region9: #{tpu_custom_call.1} parent=5 // pred_check
        _
      $region10: #{tpu_custom_call.1} parent=5 // pred_check_branch
        %78 = sbr.rel (%p75) target = $region12
      $region11: #{tpu_custom_call.1} parent=5 // pred_region
        %s79 = ssub.s32 %s13, 1
      $region12: #{tpu_custom_call.1} parent=5 // pred_fallthru
        _
      %p80 = scmp.lt.s32.totalorder %s13, 2
      // Predicated region
      $region13: #{tpu_custom_call.1} parent=5 // pred_check
        %p81 = pneg %p80
      $region14: #{tpu_custom_call.1} parent=5 // pred_check_branch
        %83 = sbr.rel (%p81) target = $region16
      $region15: #{tpu_custom_call.1} parent=5 // pred_region
        // Predicated region
        $region17: #{tpu_custom_call.1} parent=15 // pred_check
          %p84 = pneg %p33
        $region18: #{tpu_custom_call.1} parent=15 // pred_check_branch
          %86 = sbr.rel (%p84) target = $region20
        $region19: #{tpu_custom_call.1} parent=15 // pred_region
          %s87 = sand.u32 %s23, 1
          %s88 = scalar_lea.sflag [#allocation3], %s87
          %s89 = sand.u32 %s23, 1
          %s90 = smul.addr %s89, 256
          %s91 = scalar_lea.vmem [#allocation2], %s90
          %s92 = smul.u32 32, %s13
          %94 = vsyncadd %s88, 0
          %s95 = smul.addr %s92, 8
          %s96 = scalar_lea.hbm %s0, %s95
          %s97 = sshll.u32 %s96, 4
          %s98 = int_to_ptr.hbm [resolvable:$true] %s97
          %s99 = sshll.u32 %s91, 4
          %s100 = int_to_ptr.vmem [resolvable:$true] %s99
          %105 = dma.hbm_to_vmem [thread:$0]  %s98, 4096, %s100, %s88, 128, 128, 8
        $region20: #{tpu_custom_call.1} parent=15 // pred_fallthru
          _
      $region16: #{tpu_custom_call.1} parent=5 // pred_fallthru
        _
      %p106 = scmp.le.s32.totalorder 1, %s13
      %p107 = scmp.lt.s32.totalorder %s13, 3
      %p108 = pnand %p106, %p107
      %p109 = pneg %p108
      // Predicated region
      $region21: #{tpu_custom_call.1} parent=5 // pred_check
        _
      $region22: #{tpu_custom_call.1} parent=5 // pred_check_branch
        %111 = sbr.rel (%p108) target = $region24
      $region23: #{tpu_custom_call.1} parent=5 // pred_region
        %s112 = ssub.s32 %s13, 1
        %s113 = sand.u32 %s26, 1
        %s114 = scalar_lea.sflag [#allocation3], %s113
        %s115 = sand.u32 %s26, 1
        %s116 = smul.addr %s115, 256
        %s117 = scalar_lea.vmem [#allocation2], %s116
        // Predicated region
        $region25: #{tpu_custom_call.1} parent=23 // pred_check
          %p118 = pneg %p39
        $region26: #{tpu_custom_call.1} parent=23 // pred_check_branch
          %120 = sbr.rel (%p118) target = $region28
        $region27: #{tpu_custom_call.1} parent=23 // pred_region
          %122 = dma.done %s114, 4096
        $region28: #{tpu_custom_call.1} parent=23 // pred_fallthru
          _
        %s123 = sand.u32 %s26, 1
        %s124 = scalar_lea.sflag [#allocation3], %s123
        %s125 = sand.u32 %s26, 1
        %s126 = smul.addr %s125, 256
        %s127 = scalar_lea.vmem [#allocation2], %s126
        %p128 = pneg %p39
        %p129 = pneg %p36
        %p130 = pneg %p65
        %p131 = pneg %p62
        %s132 = sand.u32 %s52, 1
        %s133 = scalar_lea.sflag [#allocation4], %s132
        %s134 = sand.u32 %s52, 1
        %s135 = smul.addr %s134, 512
        %s136 = scalar_lea.vmem [#allocation5], %s135
        %s137 = smul.u32 32, %s18
        %s138 = smul.u32 32, %s18
        %v139 = vld [vmem:[%s117] sm:$0xff]
        %v140 = vld [vmem:[%s117 + $0x8] sm:$0xff]
        %v141 = vld [vmem:[%s117 + $0x10] sm:$0xff]
        %v142 = vld [vmem:[%s117 + $0x18] sm:$0xff]
        %v143 = vld [vmem:[%s117 + $0x20] sm:$0xff]
        %v144 = vld [vmem:[%s117 + $0x28] sm:$0xff]
        %v145 = vld [vmem:[%s117 + $0x30] sm:$0xff]
        %v146 = vld [vmem:[%s117 + $0x38] sm:$0xff]
        %v147 = vld [vmem:[%s117 + $0x40] sm:$0xff]
        %v148 = vld [vmem:[%s117 + $0x48] sm:$0xff]
        %v149 = vld [vmem:[%s117 + $0x50] sm:$0xff]
        %v150 = vld [vmem:[%s117 + $0x58] sm:$0xff]
        %v151 = vld [vmem:[%s117 + $0x60] sm:$0xff]
        %v152 = vld [vmem:[%s117 + $0x68] sm:$0xff]
        %v153 = vld [vmem:[%s117 + $0x70] sm:$0xff]
        %v154 = vld [vmem:[%s117 + $0x78] sm:$0xff]
        %v155 = vld [vmem:[%s117 + $0x80] sm:$0xff]
        %v156 = vld [vmem:[%s117 + $0x88] sm:$0xff]
        %v157 = vld [vmem:[%s117 + $0x90] sm:$0xff]
        %v158 = vld [vmem:[%s117 + $0x98] sm:$0xff]
        %v159 = vld [vmem:[%s117 + $0xa0] sm:$0xff]
        %v160 = vld [vmem:[%s117 + $0xa8] sm:$0xff]
        %v161 = vld [vmem:[%s117 + $0xb0] sm:$0xff]
        %v162 = vld [vmem:[%s117 + $0xb8] sm:$0xff]
        %v163 = vld [vmem:[%s117 + $0xc0] sm:$0xff]
        %v164 = vld [vmem:[%s117 + $0xc8] sm:$0xff]
        %v165 = vld [vmem:[%s117 + $0xd0] sm:$0xff]
        %v166 = vld [vmem:[%s117 + $0xd8] sm:$0xff]
        %v167 = vld [vmem:[%s117 + $0xe0] sm:$0xff]
        %v168 = vld [vmem:[%s117 + $0xe8] sm:$0xff]
        %v169 = vld [vmem:[%s117 + $0xf0] sm:$0xff]
        %v170 = vld [vmem:[%s117 + $0xf8] sm:$0xff]
        %171 = vst [vmem:[%s136] sm:$0xff] %v139
        %172 = vst [vmem:[%s136 + $0x10] sm:$0xff] %v140
        %173 = vst [vmem:[%s136 + $0x20] sm:$0xff] %v141
        %174 = vst [vmem:[%s136 + $0x30] sm:$0xff] %v142
        %175 = vst [vmem:[%s136 + $0x40] sm:$0xff] %v143
        %176 = vst [vmem:[%s136 + $0x50] sm:$0xff] %v144
        %177 = vst [vmem:[%s136 + $0x60] sm:$0xff] %v145
        %178 = vst [vmem:[%s136 + $0x70] sm:$0xff] %v146
        %179 = vst [vmem:[%s136 + $0x80] sm:$0xff] %v147
        %180 = vst [vmem:[%s136 + $0x90] sm:$0xff] %v148
        %181 = vst [vmem:[%s136 + $0xa0] sm:$0xff] %v149
        %182 = vst [vmem:[%s136 + $0xb0] sm:$0xff] %v150
        %183 = vst [vmem:[%s136 + $0xc0] sm:$0xff] %v151
        %184 = vst [vmem:[%s136 + $0xd0] sm:$0xff] %v152
        %185 = vst [vmem:[%s136 + $0xe0] sm:$0xff] %v153
        %186 = vst [vmem:[%s136 + $0xf0] sm:$0xff] %v154
        %187 = vst [vmem:[%s136 + $0x100] sm:$0xff] %v155
        %188 = vst [vmem:[%s136 + $0x110] sm:$0xff] %v156
        %189 = vst [vmem:[%s136 + $0x120] sm:$0xff] %v157
        %190 = vst [vmem:[%s136 + $0x130] sm:$0xff] %v158
        %191 = vst [vmem:[%s136 + $0x140] sm:$0xff] %v159
        %192 = vst [vmem:[%s136 + $0x150] sm:$0xff] %v160
        %193 = vst [vmem:[%s136 + $0x160] sm:$0xff] %v161
        %194 = vst [vmem:[%s136 + $0x170] sm:$0xff] %v162
        %195 = vst [vmem:[%s136 + $0x180] sm:$0xff] %v163
        %196 = vst [vmem:[%s136 + $0x190] sm:$0xff] %v164
        %197 = vst [vmem:[%s136 + $0x1a0] sm:$0xff] %v165
        %198 = vst [vmem:[%s136 + $0x1b0] sm:$0xff] %v166
        %199 = vst [vmem:[%s136 + $0x1c0] sm:$0xff] %v167
        %200 = vst [vmem:[%s136 + $0x1d0] sm:$0xff] %v168
        %201 = vst [vmem:[%s136 + $0x1e0] sm:$0xff] %v169
        %202 = vst [vmem:[%s136 + $0x1f0] sm:$0xff] %v170
        %203 = vst [vmem:[%s136 + $0x8] sm:$0xff] %v139
        %204 = vst [vmem:[%s136 + $0x18] sm:$0xff] %v140
        %205 = vst [vmem:[%s136 + $0x28] sm:$0xff] %v141
        %206 = vst [vmem:[%s136 + $0x38] sm:$0xff] %v142
        %207 = vst [vmem:[%s136 + $0x48] sm:$0xff] %v143
        %208 = vst [vmem:[%s136 + $0x58] sm:$0xff] %v144
        %209 = vst [vmem:[%s136 + $0x68] sm:$0xff] %v145
        %210 = vst [vmem:[%s136 + $0x78] sm:$0xff] %v146
        %211 = vst [vmem:[%s136 + $0x88] sm:$0xff] %v147
        %212 = vst [vmem:[%s136 + $0x98] sm:$0xff] %v148
        %213 = vst [vmem:[%s136 + $0xa8] sm:$0xff] %v149
        %214 = vst [vmem:[%s136 + $0xb8] sm:$0xff] %v150
        %215 = vst [vmem:[%s136 + $0xc8] sm:$0xff] %v151
        %216 = vst [vmem:[%s136 + $0xd8] sm:$0xff] %v152
        %217 = vst [vmem:[%s136 + $0xe8] sm:$0xff] %v153
        %218 = vst [vmem:[%s136 + $0xf8] sm:$0xff] %v154
        %219 = vst [vmem:[%s136 + $0x108] sm:$0xff] %v155
        %220 = vst [vmem:[%s136 + $0x118] sm:$0xff] %v156
        %221 = vst [vmem:[%s136 + $0x128] sm:$0xff] %v157
        %222 = vst [vmem:[%s136 + $0x138] sm:$0xff] %v158
        %223 = vst [vmem:[%s136 + $0x148] sm:$0xff] %v159
        %224 = vst [vmem:[%s136 + $0x158] sm:$0xff] %v160
        %225 = vst [vmem:[%s136 + $0x168] sm:$0xff] %v161
        %226 = vst [vmem:[%s136 + $0x178] sm:$0xff] %v162
        %227 = vst [vmem:[%s136 + $0x188] sm:$0xff] %v163
        %228 = vst [vmem:[%s136 + $0x198] sm:$0xff] %v164
        %229 = vst [vmem:[%s136 + $0x1a8] sm:$0xff] %v165
        %230 = vst [vmem:[%s136 + $0x1b8] sm:$0xff] %v166
        %231 = vst [vmem:[%s136 + $0x1c8] sm:$0xff] %v167
        %232 = vst [vmem:[%s136 + $0x1d8] sm:$0xff] %v168
        %233 = vst [vmem:[%s136 + $0x1e8] sm:$0xff] %v169
        %234 = vst [vmem:[%s136 + $0x1f8] sm:$0xff] %v170
        %s235 = sand.u32 %s52, 1
        %s236 = scalar_lea.sflag [#allocation4], %s235
        %s237 = sand.u32 %s52, 1
        %s238 = smul.addr %s237, 512
        %s239 = scalar_lea.vmem [#allocation5], %s238
        // Predicated region
        $region29: #{tpu_custom_call.1} parent=23 // pred_check
          %p240 = pneg %p62
        $region30: #{tpu_custom_call.1} parent=23 // pred_check_branch
          %242 = sbr.rel (%p240) target = $region32
        $region31: #{tpu_custom_call.1} parent=23 // pred_region
          %s243 = smul.u32 32, %s18
          %245 = vsyncadd %s236, 0
          %s246 = smul.addr %s243, 2
          %s247 = smul.addr %s246, 8
          %s248 = scalar_lea.hbm %s1, %s247
          %s249 = sshll.u32 %s239, 4
          %s250 = int_to_ptr.vmem [resolvable:$true] %s249
          %s251 = sshll.u32 %s248, 4
          %s252 = int_to_ptr.hbm [resolvable:$true] %s251
          %257 = dma.vmem_to_hbm [thread:$0]  %s250, 8192, %s252, %s236, 256, 256, 16
        $region32: #{tpu_custom_call.1} parent=23 // pred_fallthru
          _
      $region24: #{tpu_custom_call.1} parent=5 // pred_fallthru
        _
      %p258 = scmp.le.s32.totalorder 2, %s13
      // Predicated region
      $region33: #{tpu_custom_call.1} parent=5 // pred_check
        %p259 = pneg %p258
      $region34: #{tpu_custom_call.1} parent=5 // pred_check_branch
        %261 = sbr.rel (%p259) target = $region36
      $region35: #{tpu_custom_call.1} parent=5 // pred_region
        %s262 = ssub.s32 %s13, 2
        // Predicated region
        $region37: #{tpu_custom_call.1} parent=35 // pred_check
          %p263 = pneg %p68
        $region38: #{tpu_custom_call.1} parent=35 // pred_check_branch
          %265 = sbr.rel (%p263) target = $region40
        $region39: #{tpu_custom_call.1} parent=35 // pred_region
          %s266 = sand.u32 %s53, 1
          %s267 = scalar_lea.sflag [#allocation4], %s266
          %s268 = sand.u32 %s53, 1
          %s269 = smul.addr %s268, 512
          %s270 = scalar_lea.vmem [#allocation5], %s269
          %272 = dma.done %s267, 8192
        $region40: #{tpu_custom_call.1} parent=35 // pred_fallthru
          _
      $region36: #{tpu_custom_call.1} parent=5 // pred_fallthru
        _
    $region6: #{tpu_custom_call.1} parent=1 // loop_footer
      %s17 = sadd.s32 1, %s13
    $region7: #{tpu_custom_call.1} parent=1 // loop_footer_branch
      %12 = sbr.rel target = $region3
    $region8: #{tpu_custom_call.1} parent=1 // loop_exit
      _
    %273 = vsyncpa [#allocation3], 1
    %s274 = scalar_lea.sflag [#allocation3], 1
    %275 = vsyncpa %s274, 1
    %276 = vsyncpa [#allocation4], 1
    %s277 = scalar_lea.sflag [#allocation4], 1
    %278 = vsyncpa %s277, 1

</llo_original>
